<compile_context>
chip_gen: v7x
topology: tpu7x:2x2x1
jax: 0.10.0
libtpu: 0.0.40
codegen_flags: <defaults>
</compile_context>

<pallas_src>
import functools

import numpy as np

import jax
import jax.numpy as jnp
from jax.experimental import pallas as pl
from jax.experimental.pallas import tpu as pltpu


_DMA_MIN_SEGMENT_BYTES = 4096  # below this a strided HBM->HBM DMA is inefficient


# ------------------------------ helpers --------------------------------------

def _offsets(sizes):
    offs, acc = [], 0
    for s in sizes:
        offs.append(acc)
        acc += int(s)
    return offs


def _sublane_multiple(dtype):
    # Rows per vreg sublane tile: 8 for 32-bit, 16 for 16-bit, 32 for 8-bit.
    return max(8, 32 // jnp.dtype(dtype).itemsize)


def _vmem_limits():
    """(scoped_vmem_limit_bytes, per_blockset_budget_bytes), generation aware."""
    cap = None
    try:
        cap = int(pltpu.get_tpu_info().vmem_capacity_bytes)
    except Exception:
        cap = None
    if not cap:
        try:
            kind = jax.devices()[0].device_kind.lower().replace(" ", "")
            is_v7 = ("v7" in kind) or ("tpu7" in kind)
            cap = (64 if is_v7 else 128) * 1024 * 1024
        except Exception:
            cap = 64 * 1024 * 1024  # conservative fallback
    scoped = cap // 2                       # raise scoped VMEM to half physical
    scoped = min(max(scoped, 16 * 1024 * 1024), 64 * 1024 * 1024)
    budget = scoped // 2                    # inputs AND output double-buffered
    return scoped, budget


# ------------------------------ kernels ---------------------------------------

def _row_concat_kernel(widths, *refs):
    """Copy N (tm, w_i) row tiles into one lane-dense (tm, total) tile."""
    out_ref = refs[-1]
    in_refs = refs[:-1]
    for x_ref, off, w in zip(in_refs, _offsets(widths), widths):
        out_ref[:, off:off + w] = x_ref[...]


def _channel_concat_kernel(channels, *refs):
    """Copy N (tr, C_i, tc) tiles into one (tr, C_total, tc) tile (lane dense)."""
    out_ref = refs[-1]
    in_refs = refs[:-1]
    for x_ref, off, c in zip(in_refs, _offsets(channels), channels):
        out_ref[:, off:off + c, :] = x_ref[...]


def _dma_concat_kernel(widths, *refs):
    """Pure HBM->HBM strided copies: start all DMAs, then wait for all."""
    n = len(widths)
    in_refs, out_ref, sem = refs[:n], refs[n], refs[n + 1]
    copies = []
    for idx, (x_ref, off, w) in enumerate(zip(in_refs, _offsets(widths), widths)):
        cp = pltpu.make_async_copy(x_ref, out_ref.at[:, off:off + w], sem.at[idx])
        cp.start()
        copies.append(cp)
    for cp in copies:
        cp.wait()


# ------------------------------ wrapper ----------------------------------------

def concat_pallas(xs, dimension=1, path=None):
    """Pallas equivalent of torch.cat(xs, dim=dimension).

    path: None (auto) | "dma" | "rows" | "cols"  (override mainly for testing).
    """
    xs = list(xs)
    assert xs, "need at least one tensor"
    if len(xs) == 1:
        return xs[0]

    rank = xs[0].ndim
    d = dimension % rank
    ref_shape = xs[0].shape
    dtype = xs[0].dtype
    for x in xs:
        assert x.ndim == rank and x.dtype == dtype
        assert x.shape[:d] == ref_shape[:d] and x.shape[d + 1:] == ref_shape[d + 1:]

    itemsize = jnp.dtype(dtype).itemsize
    rows = int(np.prod(ref_shape[:d], dtype=np.int64)) if d > 0 else 1
    trailing = int(np.prod(ref_shape[d + 1:], dtype=np.int64)) if d + 1 < rank else 1
    channels = [int(x.shape[d]) for x in xs]
    widths = [c * trailing for c in channels]
    total = int(sum(widths))
    out_channels = int(sum(channels))
    out_shape = ref_shape[:d] + (out_channels,) + ref_shape[d + 1:]

    scoped_vmem, budget = _vmem_limits()
    sub = _sublane_multiple(dtype)
    cost = pl.CostEstimate(flops=0, transcendentals=0,
                           bytes_accessed=2 * rows * total * itemsize)

    # ---------------------------- path selection ----------------------------
    if path is None:
        min_seg = min(widths) * itemsize
        if rows == 1 or min_seg >= _DMA_MIN_SEGMENT_BYTES:
            path = "dma"
        elif (trailing % 128 == 0 and trailing >= 256
              and (rows < 2 * sub or 4 * sub * total * itemsize > budget)):
            path = "cols"
        else:
            path = "rows"

    # --------------- DMA-only: HBM->HBM strided copies, no staging ----------
    if path == "dma":
        flats = [x.reshape(rows, w) for x, w in zip(xs, widths)]
        out2d = pl.pallas_call(
            functools.partial(_dma_concat_kernel, widths),
            out_shape=jax.ShapeDtypeStruct((rows, total), dtype),
            in_specs=[pl.BlockSpec(memory_space=pl.ANY)] * len(xs),
            out_specs=pl.BlockSpec(memory_space=pl.ANY),
            scratch_shapes=[pltpu.SemaphoreType.DMA((len(xs),))],
            cost_estimate=cost,
        )(*flats)
        return out2d.reshape(out_shape)

    # --------------- column-tiled 3-D path (tiny rows / huge columns) -------
    if path == "cols":
        assert trailing % 128 == 0, "column-tiled path needs 128-aligned trailing axis"
        x3d = [x.reshape(rows, c, trailing) for x, c in zip(xs, channels)]
        tr = rows if rows <= sub else sub
        tc = budget // max(1, 4 * tr * out_channels * itemsize)
        tc = max(128, (tc // 128) * 128)
        tc = min(tc, trailing)
        if pl.cdiv(rows, tr) == 1 and trailing >= 256:
            # ensure >= 2 lane-axis grid steps so v7x's 2 TCs both get work
            tc = min(tc, max(128, ((trailing // 2) // 128) * 128))
        grid = (pl.cdiv(rows, tr), pl.cdiv(trailing, tc))
        out3d = pl.pallas_call(
            functools.partial(_channel_concat_kernel, channels),
            out_shape=jax.ShapeDtypeStruct((rows, out_channels, trailing), dtype),
            grid=grid,
            in_specs=[pl.BlockSpec((tr, c, tc), lambda r, t: (r, 0, t))
                      for c in channels],
            out_specs=pl.BlockSpec((tr, out_channels, tc), lambda r, t: (r, 0, t)),
            compiler_params=pltpu.CompilerParams(
                dimension_semantics=("parallel", "parallel"),
                vmem_limit_bytes=scoped_vmem,
            ),
            cost_estimate=cost,
        )(*x3d)
        return out3d.reshape(out_shape)

    # --------------- row-tiled 2-D path (default fallback) ------------------
    flats = [x.reshape(rows, w) for x, w in zip(xs, widths)]
    # footprint per step ~= 2 (in+out) * 2 (double-buffer) * tm * total * itemsize
    tm = budget // max(1, 4 * total * itemsize)
    tm = max(sub, (tm // sub) * sub)           # dtype-aware sublane rounding
    if rows >= 2 * sub:
        # cap so the parallel row grid has >= 2 steps (v7x megacore sharding)
        tm = min(tm, max(sub, ((rows // 2) // sub) * sub))
    tm = min(tm, rows)
    grid = (pl.cdiv(rows, tm),)
    # Note: if profiling on v5e shows exposed input DMA at this tile size, add
    # pipeline_mode=pl.Buffered(3) to the input BlockSpecs instead of shrinking.
    out2d = pl.pallas_call(
        functools.partial(_row_concat_kernel, widths),
        out_shape=jax.ShapeDtypeStruct((rows, total), dtype),
        grid=grid,
        in_specs=[pl.BlockSpec((tm, w), lambda i: (i, 0)) for w in widths],
        out_specs=pl.BlockSpec((tm, total), lambda i: (i, 0)),
        compiler_params=pltpu.CompilerParams(
            dimension_semantics=("parallel",),
            vmem_limit_bytes=scoped_vmem,
        ),
        cost_estimate=cost,
    )(*flats)
    return out2d.reshape(out_shape)


# -------------------------------- main ------------------------------------------

if __name__ == "__main__":
    key = jax.random.PRNGKey(0)

    def make_inputs(shapes, dtype, k):
        keys = jax.random.split(k, len(shapes))
        return [jax.random.normal(kk, s, dtype=jnp.float32).astype(dtype)
                for kk, s in zip(keys, shapes)]

    spec_shapes = [(2, 4, 16, 16), (2, 8, 16, 16), (2, 4, 16, 16)]
    cases = [
        # (name, shapes, dim, dtype, forced_path)
        ("spec/auto-dma", spec_shapes, 1, jnp.float32, None),
        ("spec/rows",     spec_shapes, 1, jnp.float32, "rows"),
        ("spec/cols",     spec_shapes, 1, jnp.float32, "cols"),
        ("tiny-batch/auto-cols", [(2, 3, 16, 16), (2, 5, 16, 16)], 1, jnp.float32, None),
        ("bf16/auto-rows", [(4, 8, 6, 32), (4, 8, 10, 32)], 2, jnp.bfloat16, None),
    ]

    case_keys = jax.random.split(key, len(cases))
    for (name, shapes, dim, dtype, forced), k in zip(cases, case_keys):
        xs = make_inputs(shapes, dtype, k)
        out = jax.block_until_ready(concat_pallas(xs, dimension=dim, path=forced))
        ref = jax.block_until_ready(jnp.concatenate(xs, axis=dim))
        assert out.shape == ref.shape, f"{name}: shape {out.shape} != {ref.shape}"
        np.testing.assert_array_equal(np.asarray(out), np.asarray(ref),
                                      err_msg=f"mismatch in case {name}")

    print("KERNEL_OK")
</pallas_src>

<mosaic_0001>
module attributes {stable_mosaic.version = 11 : i64} {
  func.func @_dma_concat_kernel(%arg0: memref<2x1024xf32, #tpu.memory_space<any>>, %arg1: memref<2x2048xf32, #tpu.memory_space<any>>, %arg2: memref<2x1024xf32, #tpu.memory_space<any>>, %arg3: memref<2x4096xf32, #tpu.memory_space<any>>, %arg4: memref<3x!tpu.dma_semaphore, #tpu.memory_space<semaphore_mem>>) attributes {dimension_semantics = [], scalar_prefetch = 0 : i64, scratch_operands = 1 : i64, tpu.core_type = #tpu.core_type<tc>} {
    %c0_i32 = arith.constant 0 : i32
    %c0_i32_0 = arith.constant 0 : i32
    %c0_i32_1 = arith.constant 0 : i32
    %0 = tpu.memref_slice %arg3[%c0_i32_0, %c0_i32_1] : memref<2x4096xf32, #tpu.memory_space<any>> -> memref<2x1024xf32, #tpu.memory_space<any>>
    %1 = tpu.memref_slice %arg4[%c0_i32] : memref<3x!tpu.dma_semaphore, #tpu.memory_space<semaphore_mem>> -> memref<1x!tpu.dma_semaphore, #tpu.memory_space<semaphore_mem>>
    %2 = tpu.memref_squeeze %1 : memref<1x!tpu.dma_semaphore, #tpu.memory_space<semaphore_mem>> -> memref<!tpu.dma_semaphore, #tpu.memory_space<semaphore_mem>>
    tpu.enqueue_dma source(%arg0 : memref<2x1024xf32, #tpu.memory_space<any>>) target(%0 : memref<2x1024xf32, #tpu.memory_space<any>>) target_semaphore(%2 : memref<!tpu.dma_semaphore, #tpu.memory_space<semaphore_mem>>)
    %c1_i32 = arith.constant 1 : i32
    %c0_i32_2 = arith.constant 0 : i32
    %c1024_i32 = arith.constant 1024 : i32
    %3 = tpu.memref_slice %arg3[%c0_i32_2, %c1024_i32] : memref<2x4096xf32, #tpu.memory_space<any>> -> memref<2x2048xf32, #tpu.memory_space<any>>
    %4 = tpu.memref_slice %arg4[%c1_i32] : memref<3x!tpu.dma_semaphore, #tpu.memory_space<semaphore_mem>> -> memref<1x!tpu.dma_semaphore, #tpu.memory_space<semaphore_mem>>
    %5 = tpu.memref_squeeze %4 : memref<1x!tpu.dma_semaphore, #tpu.memory_space<semaphore_mem>> -> memref<!tpu.dma_semaphore, #tpu.memory_space<semaphore_mem>>
    tpu.enqueue_dma source(%arg1 : memref<2x2048xf32, #tpu.memory_space<any>>) target(%3 : memref<2x2048xf32, #tpu.memory_space<any>>) target_semaphore(%5 : memref<!tpu.dma_semaphore, #tpu.memory_space<semaphore_mem>>)
    %c2_i32 = arith.constant 2 : i32
    %c0_i32_3 = arith.constant 0 : i32
    %c3072_i32 = arith.constant 3072 : i32
    %6 = tpu.memref_slice %arg3[%c0_i32_3, %c3072_i32] : memref<2x4096xf32, #tpu.memory_space<any>> -> memref<2x1024xf32, #tpu.memory_space<any>>
    %7 = tpu.memref_slice %arg4[%c2_i32] : memref<3x!tpu.dma_semaphore, #tpu.memory_space<semaphore_mem>> -> memref<1x!tpu.dma_semaphore, #tpu.memory_space<semaphore_mem>>
    %8 = tpu.memref_squeeze %7 : memref<1x!tpu.dma_semaphore, #tpu.memory_space<semaphore_mem>> -> memref<!tpu.dma_semaphore, #tpu.memory_space<semaphore_mem>>
    tpu.enqueue_dma source(%arg2 : memref<2x1024xf32, #tpu.memory_space<any>>) target(%6 : memref<2x1024xf32, #tpu.memory_space<any>>) target_semaphore(%8 : memref<!tpu.dma_semaphore, #tpu.memory_space<semaphore_mem>>)
    %c0_i32_4 = arith.constant 0 : i32
    %c0_i32_5 = arith.constant 0 : i32
    %c0_i32_6 = arith.constant 0 : i32
    %9 = tpu.memref_slice %arg3[%c0_i32_5, %c0_i32_6] : memref<2x4096xf32, #tpu.memory_space<any>> -> memref<2x1024xf32, #tpu.memory_space<any>>
    %10 = tpu.memref_slice %arg4[%c0_i32_4] : memref<3x!tpu.dma_semaphore, #tpu.memory_space<semaphore_mem>> -> memref<1x!tpu.dma_semaphore, #tpu.memory_space<semaphore_mem>>
    %11 = tpu.memref_squeeze %10 : memref<1x!tpu.dma_semaphore, #tpu.memory_space<semaphore_mem>> -> memref<!tpu.dma_semaphore, #tpu.memory_space<semaphore_mem>>
    tpu.wait_dma2 semaphore(%11 : memref<!tpu.dma_semaphore, #tpu.memory_space<semaphore_mem>>) src(%arg0 : memref<2x1024xf32, #tpu.memory_space<any>>) dst(%9 : memref<2x1024xf32, #tpu.memory_space<any>>)
    %c1_i32_7 = arith.constant 1 : i32
    %c0_i32_8 = arith.constant 0 : i32
    %c1024_i32_9 = arith.constant 1024 : i32
    %12 = tpu.memref_slice %arg3[%c0_i32_8, %c1024_i32_9] : memref<2x4096xf32, #tpu.memory_space<any>> -> memref<2x2048xf32, #tpu.memory_space<any>>
    %13 = tpu.memref_slice %arg4[%c1_i32_7] : memref<3x!tpu.dma_semaphore, #tpu.memory_space<semaphore_mem>> -> memref<1x!tpu.dma_semaphore, #tpu.memory_space<semaphore_mem>>
    %14 = tpu.memref_squeeze %13 : memref<1x!tpu.dma_semaphore, #tpu.memory_space<semaphore_mem>> -> memref<!tpu.dma_semaphore, #tpu.memory_space<semaphore_mem>>
    tpu.wait_dma2 semaphore(%14 : memref<!tpu.dma_semaphore, #tpu.memory_space<semaphore_mem>>) src(%arg1 : memref<2x2048xf32, #tpu.memory_space<any>>) dst(%12 : memref<2x2048xf32, #tpu.memory_space<any>>)
    %c2_i32_10 = arith.constant 2 : i32
    %c0_i32_11 = arith.constant 0 : i32
    %c3072_i32_12 = arith.constant 3072 : i32
    %15 = tpu.memref_slice %arg3[%c0_i32_11, %c3072_i32_12] : memref<2x4096xf32, #tpu.memory_space<any>> -> memref<2x1024xf32, #tpu.memory_space<any>>
    %16 = tpu.memref_slice %arg4[%c2_i32_10] : memref<3x!tpu.dma_semaphore, #tpu.memory_space<semaphore_mem>> -> memref<1x!tpu.dma_semaphore, #tpu.memory_space<semaphore_mem>>
    %17 = tpu.memref_squeeze %16 : memref<1x!tpu.dma_semaphore, #tpu.memory_space<semaphore_mem>> -> memref<!tpu.dma_semaphore, #tpu.memory_space<semaphore_mem>>
    tpu.wait_dma2 semaphore(%17 : memref<!tpu.dma_semaphore, #tpu.memory_space<semaphore_mem>>) src(%arg2 : memref<2x1024xf32, #tpu.memory_space<any>>) dst(%15 : memref<2x1024xf32, #tpu.memory_space<any>>)
    return
  }
}

</mosaic_0001>

<llo_original>
// kernel: tpu_custom_call.1
$region0: #{tpu_custom_call.1}
  #allocation0 [shape = 'u32[]', space=smem, size = 0x4, offset = 0x4, fixed_abs, tag = 'smem constant byte address 0x4 - core index']
  #allocation1 [shape = 'u32[144,128]{1,0:T(1,128)}', space=vmem, size = 0x12000, scoped, tag = 'internal scratch']
  #allocation2 [shape = 's32[3]{0}', space=sflag, size = 0xc, scoped, tag = 'scratch operand']
  #allocation3 [shape = 's32[]', space=sflag, size = 0x4, offset = 0, fixed_abs, tag = 'sflag constant byte address 0x0 - dummy sync flag']
  #allocation4 [shape = 'u32[0]{0}', space=smem, size = 0, offset = 0, fixed_abs, tag = 'smem constant byte address 0x0 - null']
  #allocation5 [shape = 's32[]', space=sflag, size = 0x4, offset = 0, fixed_abs, tag = 'sflag constant byte address 0x0 - dummy sync flag']
  #allocation6 [shape = 'u32[0]{0}', space=smem, size = 0, offset = 0, fixed_abs, tag = 'smem constant byte address 0x0 - null']
  #allocation7 [shape = 's32[]', space=sflag, size = 0x4, offset = 0, fixed_abs, tag = 'sflag constant byte address 0x0 - dummy sync flag']
  #allocation8 [shape = 'u32[0]{0}', space=smem, size = 0, offset = 0, fixed_abs, tag = 'smem constant byte address 0x0 - null']
  %s0 = inlined_call_operand.hbm [shape: f32[2,1024], index: 0, kind: input, shape index: {}]
  %s1 = inlined_call_operand.hbm [shape: f32[2,2048], index: 1, kind: input, shape index: {}]
  %s2 = inlined_call_operand.hbm [shape: f32[2,1024], index: 2, kind: input, shape index: {}]
  %s3 = inlined_call_operand.hbm [shape: f32[2,4096], index: 3, kind: output, shape index: {}]
  %s4 = sld [smem:[#allocation0]]
  $region2: #{tpu_custom_call.1} parent=0
    _
  %s6 = ssub.s32 1, %s4
  %s7 = scalar_select 0, %s6, %s4
  %s9 = sshll.u32 1, 14
  %s10 = sxor.u32 4294967295, %s9
  %s13 = sshll.u32 3, 24
  %s14 = sxor.u32 4294967295, %s13
  %s15 = sand.u32 0, %s14
  %s17 = sor.u32 %s15, 0
  %20 = dma.general %s0, 256, %s3, [#allocation2], [#allocation3], [#allocation4], %s17, 0
  %s21 = scalar_lea.hbm %s3, 256
  %s22 = scalar_lea.sflag [#allocation2], 1
  %s24 = sshll.u32 1, 14
  %s25 = sxor.u32 4294967295, %s24
  %s28 = sshll.u32 3, 24
  %s29 = sxor.u32 4294967295, %s28
  %s30 = sand.u32 0, %s29
  %s32 = sor.u32 %s30, 0
  %35 = dma.general %s1, 512, %s21, %s22, [#allocation5], [#allocation6], %s32, 0
  %s36 = scalar_lea.hbm %s3, 768
  %s37 = scalar_lea.sflag [#allocation2], 2
  %s39 = sshll.u32 1, 14
  %s40 = sxor.u32 4294967295, %s39
  %s43 = sshll.u32 3, 24
  %s44 = sxor.u32 4294967295, %s43
  %s45 = sand.u32 0, %s44
  %s47 = sor.u32 %s45, 0
  %50 = dma.general %s2, 256, %s36, %s37, [#allocation7], [#allocation8], %s47, 0
  %s51 = smul.u32 2, 1
  %s52 = smul.u32 %s51, 8
  %s53 = sshll.u32 %s52, 4
  %54 = dma.done [#allocation2], %s53
  %s55 = smul.u32 %s51, 16
  %s56 = sshll.u32 %s55, 4
  %57 = dma.done %s22, %s56
  %s58 = sshll.u32 %s52, 4
  %59 = dma.done %s37, %s58
  %60 = vsyncmov [#allocation2]
  %s61 = vpop.sfrf %60
  %p62 = scmp.eq.s32.totalorder %s61, 0
  %p63 = pneg %p62
  %65 = shalt.err (%p63)
  %s66 = scalar_lea.sflag [#allocation2], 1
  %67 = vsyncmov %s66
  %s68 = vpop.sfrf %67
  %p69 = scmp.eq.s32.totalorder %s68, 0
  %p70 = pneg %p69
  %72 = shalt.err (%p70)
  %s73 = scalar_lea.sflag [#allocation2], 2
  %74 = vsyncmov %s73
  %s75 = vpop.sfrf %74
  %p76 = scmp.eq.s32.totalorder %s75, 0
  %p77 = pneg %p76
  %79 = shalt.err (%p77)

</llo_original>
